<compile_context>
chip_gen: v7x
topology: tpu7x:2x2x1
jax: 0.10.0
libtpu: 0.0.40
codegen_flags: <defaults>
</compile_context>

<pallas_src>
import functools

import jax
import jax.numpy as jnp
from jax import lax
from jax.experimental import pallas as pl
from jax.experimental.pallas import tpu as pltpu

EPS = 1e-5
NEG_SLOPE = 0.2
LANE = 128


def _round_up(x, m):
    return (x + m - 1) // m * m


def _instance_norm_lrelu(y):
    """Fused InstanceNorm (affine=False, biased var) + LeakyReLU(0.2) on (P, TC) f32."""
    inv_p = 1.0 / y.shape[0]
    s = jnp.sum(y, axis=0, keepdims=True)                  # (1, TC)
    ss = jnp.sum(y * y, axis=0, keepdims=True)             # (1, TC)
    mean = s * inv_p
    var = jnp.maximum(ss * inv_p - mean * mean, 0.0)       # guard cancellation
    inv_std = lax.rsqrt(var + EPS)
    y_norm = y * inv_std + (-mean) * inv_std               # single FMA pass
    # LeakyReLU(0.2) == max(y, 0.2*y) for 0 < slope < 1 (one cmp-free max).
    return jnp.maximum(y_norm, NEG_SLOPE * y_norm)


def _c4s2_kernel_single_k(p_ref, w_ref, o_ref):
    # Grid = (batch, cout_tile); the whole contraction K is one block.
    #   p_ref : (1, P, K)  bf16    w_ref : (K, TC) bf16    o_ref : (1, P, TC)
    y = jnp.dot(p_ref[0], w_ref[...], preferred_element_type=jnp.float32)
    o_ref[0] = _instance_norm_lrelu(y).astype(o_ref.dtype)


def _c4s2_kernel_multi_k(p_ref, w_ref, o_ref, acc_ref):
    # Grid = (batch, cout_tile, k_tile); K (reduction) innermost.
    #   p_ref  : (1, P, TK) bf16    w_ref : (TK, TC) bf16
    #   o_ref  : (1, P, TC)         acc_ref: (P, TC) f32 accumulator
    k = pl.program_id(2)

    @pl.when(k == 0)
    def _():
        acc_ref[...] = jnp.zeros_like(acc_ref)

    acc_ref[...] += jnp.dot(p_ref[0], w_ref[...],
                            preferred_element_type=jnp.float32)

    @pl.when(k == pl.num_programs(2) - 1)
    def _():
        o_ref[0] = _instance_norm_lrelu(acc_ref[...]).astype(o_ref.dtype)


def _im2col(x_nhwc, kh, kw, stride):
    """(N,H,W,C) -> (N, Ho*Wo, kh*kw*C) with patch element order (kh, kw, c)."""
    n, h, w, c = x_nhwc.shape
    ho = (h - kh) // stride + 1
    wo = (w - kw) // stride + 1
    cols = []
    for i in range(kh):
        for j in range(kw):
            cols.append(
                x_nhwc[:, i:i + stride * (ho - 1) + 1:stride,
                       j:j + stride * (wo - 1) + 1:stride, :]
            )  # (N, Ho, Wo, C)
    p = jnp.stack(cols, axis=3)                            # (N, Ho, Wo, kh*kw, C)
    return p.reshape(n, ho * wo, kh * kw * c), ho, wo


def _vmem_caps():
    """(tile_budget_bytes, vmem_limit_bytes), derived from the actual chip."""
    phys = None
    try:
        phys = getattr(pltpu.get_tpu_info(), "vmem_capacity_bytes", None)
    except Exception:
        phys = None
    if not phys:
        phys = 64 * 1024 * 1024            # conservative default (v7x per-TC)
    return int(phys * 0.60), int(phys * 0.85)


def _choose_tiles(n, p, k, cout, out_bytes, budget):
    """Pick (mode, tk, tc, k_pad, cout_pad).

    Prefers a single full-K block (no K padding, no accumulator), then the
    widest 256-aligned Cout tile that fits the double-buffered working set.
    """
    cout_pad = _round_up(cout, LANE)
    tc_cands = [t for t in (512, 256, 128) if t <= cout_pad and cout_pad % t == 0]
    if not tc_cands:
        tc_cands = [cout_pad]
    # With batch==1 keep >=2 Cout tiles so both v7x TensorCores get work.
    if n == 1:
        narrowed = [t for t in tc_cands if cout_pad // t >= 2]
        tc_cands = narrowed or [min(tc_cands)]

    def fits_single(tc):
        est = (2 * p * k * 2               # patches block, double-buffered bf16
               + 2 * k * tc * 2            # weight block, double-buffered bf16
               + 2 * p * tc * out_bytes)   # output block, double-buffered
        return est <= budget

    def fits_multi(tc, tk):
        est = (2 * p * tk * 2
               + 2 * tk * tc * 2
               + 2 * p * tc * out_bytes
               + p * tc * 4)               # f32 accumulator scratch
        return est <= budget

    for tc in tc_cands:                    # widest Cout tile first
        if fits_single(tc):
            return dict(mode="single", tc=tc, tk=k, k_pad=k, cout_pad=cout_pad)
    for tc in tc_cands:
        for tk in (2048, 1024, 512, 256, 128):
            if tk >= k:
                continue                   # would be single-K; already rejected
            if fits_multi(tc, tk):
                return dict(mode="multi", tc=tc, tk=tk,
                            k_pad=_round_up(k, tk), cout_pad=cout_pad)
    # Fallback: smallest tiles (practical CycleGAN shapes never reach this).
    return dict(mode="multi", tc=128, tk=128,
                k_pad=_round_up(k, 128), cout_pad=cout_pad)


@functools.partial(jax.jit, static_argnames=("stride", "out_dtype"))
def c4s2_forward(x_nchw, weight_oihw, bias=None, *, stride=2,
                 out_dtype=jnp.bfloat16):
    """Forward pass of c4s2. Input/output are NCHW to match PyTorch.

    `bias` is accepted for interface parity but intentionally unused: a
    per-channel conv bias is cancelled exactly by InstanceNorm2d(affine=False).
    """
    del bias
    cout, cin, kh, kw = weight_oihw.shape
    x_nhwc = jnp.transpose(x_nchw, (0, 2, 3, 1))           # glue: NCHW -> NHWC
    patches, ho, wo = _im2col(x_nhwc, kh, kw, stride)      # (N, P, K)
    n, p, k = patches.shape

    out_bytes = jnp.dtype(out_dtype).itemsize
    tile_budget, vmem_limit = _vmem_caps()
    cfg = _choose_tiles(n, p, k, cout, out_bytes, tile_budget)
    tc, tk = cfg["tc"], cfg["tk"]
    k_pad, cout_pad = cfg["k_pad"], cfg["cout_pad"]

    patches = patches.astype(jnp.bfloat16)
    if k_pad != k:
        patches = jnp.pad(patches, ((0, 0), (0, 0), (0, k_pad - k)))
    # (Cout, Cin, KH, KW) -> (KH, KW, Cin, Cout) -> (K, Cout), matching patch order.
    w_flat = jnp.transpose(weight_oihw, (2, 3, 1, 0)).reshape(k, cout)
    w_flat = jnp.pad(w_flat, ((0, k_pad - k), (0, cout_pad - cout))).astype(jnp.bfloat16)

    out_shape = jax.ShapeDtypeStruct((n, p, cout_pad), out_dtype)

    if cfg["mode"] == "single":
        out = pl.pallas_call(
            _c4s2_kernel_single_k,
            out_shape=out_shape,
            grid_spec=pltpu.PrefetchScalarGridSpec(
                num_scalar_prefetch=0,
                grid=(n, cout_pad // tc),
                in_specs=[
                    pl.BlockSpec((1, p, k_pad), lambda i, c: (i, 0, 0)),
                    pl.BlockSpec((k_pad, tc), lambda i, c: (0, c)),
                ],
                out_specs=pl.BlockSpec((1, p, tc), lambda i, c: (i, 0, c)),
            ),
            compiler_params=pltpu.CompilerParams(
                dimension_semantics=("parallel", "parallel"),
                vmem_limit_bytes=vmem_limit,
            ),
        )(patches, w_flat)
    else:
        out = pl.pallas_call(
            _c4s2_kernel_multi_k,
            out_shape=out_shape,
            grid_spec=pltpu.PrefetchScalarGridSpec(
                num_scalar_prefetch=0,
                grid=(n, cout_pad // tc, k_pad // tk),
                in_specs=[
                    pl.BlockSpec((1, p, tk), lambda i, c, l: (i, 0, l)),
                    pl.BlockSpec((tk, tc), lambda i, c, l: (l, c)),
                ],
                out_specs=pl.BlockSpec((1, p, tc), lambda i, c, l: (i, 0, c)),
                scratch_shapes=[pltpu.VMEM((p, tc), jnp.float32)],
            ),
            compiler_params=pltpu.CompilerParams(
                dimension_semantics=("parallel", "parallel", "arbitrary"),
                vmem_limit_bytes=vmem_limit,
            ),
        )(patches, w_flat)

    out = out[:, :, :cout]                                 # drop Cout padding
    # (N, P, Cout) -> (N, Ho, Wo, Cout) -> NCHW
    return jnp.transpose(out.reshape(n, ho, wo, cout), (0, 3, 1, 2))


def _reference(x_nchw, weight_oihw, bias, stride=2):
    """Pure-JAX reference with bf16-rounded conv inputs (matches MXU path).

    The bias IS added here, to verify it is cancelled by InstanceNorm.
    """
    xq = x_nchw.astype(jnp.bfloat16).astype(jnp.float32)
    wq = weight_oihw.astype(jnp.bfloat16).astype(jnp.float32)
    y = lax.conv_general_dilated(
        xq, wq, window_strides=(stride, stride), padding="VALID",
        dimension_numbers=("NCHW", "OIHW", "NCHW"),
    ) + bias.reshape(1, -1, 1, 1)
    mean = jnp.mean(y, axis=(2, 3), keepdims=True)
    var = jnp.mean((y - mean) ** 2, axis=(2, 3), keepdims=True)
    yn = (y - mean) * lax.rsqrt(var + EPS)
    return jnp.where(yn >= 0, yn, NEG_SLOPE * yn)


if __name__ == "__main__":
    key = jax.random.PRNGKey(0)
    k_x, k_w, k_b = jax.random.split(key, 3)

    N, Cin, Cout, H, W = 2, 4, 8, 16, 16        # small, module-consistent shapes
    x = jax.random.normal(k_x, (N, Cin, H, W), dtype=jnp.float32)
    weight = jax.random.normal(k_w, (Cout, Cin, 4, 4), dtype=jnp.float32) * 0.1
    bias = jax.random.normal(k_b, (Cout,), dtype=jnp.float32) * 0.1

    ref = _reference(x, weight, bias, stride=2)

    # f32-output path: tight correctness check against the reference.
    out_f32 = jax.block_until_ready(
        c4s2_forward(x, weight, bias, stride=2, out_dtype=jnp.float32))
    assert out_f32.shape == (N, Cout, 7, 7), out_f32.shape
    err_f32 = float(jnp.max(jnp.abs(out_f32 - ref)))
    assert err_f32 < 1e-2, f"f32 path mismatch vs reference: max_err={err_f32}"

    # Default bf16-output path (halves HBM writeback; next layer consumes bf16).
    out_bf16 = jax.block_until_ready(c4s2_forward(x, weight, bias, stride=2))
    assert out_bf16.shape == (N, Cout, 7, 7), out_bf16.shape
    err_bf16 = float(jnp.max(jnp.abs(out_bf16.astype(jnp.float32) - ref)))
    assert err_bf16 < 5e-2, f"bf16 path mismatch vs reference: max_err={err_bf16}"

    print("KERNEL_OK")
</pallas_src>

<mosaic_0001>
module attributes {stable_mosaic.version = 11 : i64} {
  func.func @_c4s2_kernel_single_k(%arg0: i32, %arg1: i32, %arg2: memref<1x49x64xbf16, #tpu.memory_space<vmem>>, %arg3: memref<64x128xbf16, #tpu.memory_space<vmem>>, %arg4: memref<1x49x128xf32, #tpu.memory_space<vmem>>) attributes {dimension_semantics = [#tpu.dimension_semantics<parallel>, #tpu.dimension_semantics<parallel>], iteration_bounds = array<i64: 2, 1>, scalar_prefetch = 0 : i64, scratch_operands = 0 : i64, tpu.core_type = #tpu.core_type<tc>, window_params = [{transform_indices = @transform_0, window_bounds = array<i64: 1, 49, 64>}, {transform_indices = @transform_1, window_bounds = array<i64: 64, 128>}, {transform_indices = @transform_2, window_bounds = array<i64: 1, 49, 128>}]} {
    %c0 = arith.constant 0 : index
    %c0_0 = arith.constant 0 : index
    %c0_1 = arith.constant 0 : index
    %0 = vector.load %arg2[%c0, %c0_0, %c0_1] : memref<1x49x64xbf16, #tpu.memory_space<vmem>>, vector<1x49x64xbf16>
    %1 = vector.shape_cast %0 : vector<1x49x64xbf16> to vector<49x64xbf16>
    %c0_2 = arith.constant 0 : index
    %c0_3 = arith.constant 0 : index
    %2 = vector.load %arg3[%c0_2, %c0_3] : memref<64x128xbf16, #tpu.memory_space<vmem>>, vector<64x128xbf16>
    %cst = arith.constant dense<0.000000e+00> : vector<49x128xf32>
    %3 = tpu.matmul %1, %2, %cst {dimension_numbers = #tpu.dot_dimension_numbers<[1], [0], [0], [1], [0, 0, 1, 1], [], []>} : vector<49x64xbf16>, vector<64x128xbf16>, vector<49x128xf32> -> vector<49x128xf32>
    %cst_4 = arith.constant dense<0.000000e+00> : vector<128xf32>
    %4 = vector.multi_reduction <add>, %3, %cst_4 [0] : vector<49x128xf32> to vector<128xf32>
    %5 = vector.shape_cast %4 : vector<128xf32> to vector<1x128xf32>
    %6 = arith.mulf %3, %3 : vector<49x128xf32>
    %cst_5 = arith.constant dense<0.000000e+00> : vector<128xf32>
    %7 = vector.multi_reduction <add>, %6, %cst_5 [0] : vector<49x128xf32> to vector<128xf32>
    %8 = vector.shape_cast %7 : vector<128xf32> to vector<1x128xf32>
    %cst_6 = arith.constant 0.0204081628 : f32
    %9 = vector.broadcast %cst_6 : f32 to vector<1x128xf32>
    %10 = arith.mulf %5, %9 : vector<1x128xf32>
    %cst_7 = arith.constant 0.0204081628 : f32
    %11 = vector.broadcast %cst_7 : f32 to vector<1x128xf32>
    %12 = arith.mulf %8, %11 : vector<1x128xf32>
    %13 = arith.mulf %10, %10 : vector<1x128xf32>
    %14 = arith.subf %12, %13 : vector<1x128xf32>
    %cst_8 = arith.constant 0.000000e+00 : f32
    %15 = vector.broadcast %cst_8 : f32 to vector<1x128xf32>
    %16 = arith.maximumf %14, %15 : vector<1x128xf32>
    %cst_9 = arith.constant 9.99999974E-6 : f32
    %17 = vector.broadcast %cst_9 : f32 to vector<1x128xf32>
    %18 = arith.addf %16, %17 : vector<1x128xf32>
    %19 = math.rsqrt %18 : vector<1x128xf32>
    %20 = vector.broadcast %19 : vector<1x128xf32> to vector<49x128xf32>
    %21 = arith.mulf %3, %20 : vector<49x128xf32>
    %cst_10 = arith.constant 0.000000e+00 : f32
    %22 = vector.broadcast %cst_10 : f32 to vector<1x128xf32>
    %23 = arith.subf %22, %10 : vector<1x128xf32>
    %24 = arith.mulf %23, %19 : vector<1x128xf32>
    %25 = vector.broadcast %24 : vector<1x128xf32> to vector<49x128xf32>
    %26 = arith.addf %21, %25 : vector<49x128xf32>
    %cst_11 = arith.constant 2.000000e-01 : f32
    %27 = vector.broadcast %cst_11 : f32 to vector<49x128xf32>
    %28 = arith.mulf %27, %26 : vector<49x128xf32>
    %29 = arith.maximumf %26, %28 : vector<49x128xf32>
    %c0_12 = arith.constant 0 : index
    %c0_13 = arith.constant 0 : index
    %c0_14 = arith.constant 0 : index
    %30 = vector.load %arg4[%c0_12, %c0_13, %c0_14] : memref<1x49x128xf32, #tpu.memory_space<vmem>>, vector<1x49x128xf32>
    %31 = vector.shape_cast %30 : vector<1x49x128xf32> to vector<49x128xf32>
    %32 = vector.shape_cast %29 : vector<49x128xf32> to vector<1x49x128xf32>
    tpu.vector_store %arg4[%c0_12, %c0_13, %c0_14], %32 {strides = array<i32>} : memref<1x49x128xf32, #tpu.memory_space<vmem>>, vector<1x49x128xf32>,
    return
  }
  func.func @transform_0(%arg0: i32, %arg1: i32) -> (i32, i32, i32) {
    %c0_i32 = arith.constant 0 : i32
    %c0_i32_0 = arith.constant 0 : i32
    %c0_i32_1 = arith.constant 0 : i32
    return %arg0, %c0_i32, %c0_i32_0 : i32, i32, i32
  }
  func.func @transform_1(%arg0: i32, %arg1: i32) -> (i32, i32) {
    %c0_i32 = arith.constant 0 : i32
    %c0_i32_0 = arith.constant 0 : i32
    return %c0_i32, %arg1 : i32, i32
  }
  func.func @transform_2(%arg0: i32, %arg1: i32) -> (i32, i32, i32) {
    %c0_i32 = arith.constant 0 : i32
    %c0_i32_0 = arith.constant 0 : i32
    return %arg0, %c0_i32, %arg1 : i32, i32, i32
  }
}

</mosaic_0001>

<llo_original>
// kernel: c4s2_forward.1
$region0: #{c4s2_forward.1}
  #allocation0 [shape = 'u32[]', space=smem, size = 0x4, offset = 0x4, fixed_abs, tag = 'smem constant byte address 0x4 - core index']
  #allocation1 [shape = 'u32[144,128]{1,0:T(1,128)}', space=vmem, size = 0x12000, scoped, tag = 'internal scratch']
  %s0 = inlined_call_operand.vmem [shape: bf16[2,49,64], index: 0, kind: input, shape index: {}]
  %s1 = inlined_call_operand.vmem [shape: bf16[64,128], index: 1, kind: input, shape index: {}]
  %s2 = inlined_call_operand.vmem [shape: f32[2,49,128], index: 2, kind: output, shape index: {}]
  %s3 = sld [smem:[#allocation0]]
  $region41: #{c4s2_forward.1} parent=0
    _
  %s5 = ssub.s32 1, %s3
  %s6 = scalar_select 0, %s5, %s3
  loop: start=0, step=1, limit=4
  $region2: #{c4s2_forward.1} parent=0 // loop_pre_header
    _
  $region3: #{c4s2_forward.1} parent=0 // loop_header
    %s8 = sphi 0, %s12
    %p9 = scmp.ge.s32.totalorder %s8, 4
    %s15 = sphi 0, %s27
    %s16 = sphi 0, %s23
    %s17 = sphi 0, %s15
    %s18 = sphi 0, %s16
    %s19 = sphi 0, %s17
    %s20 = sphi 0, %s18
    %s30 = sphi 0, %s32
    %s33 = sphi 0, %s30
    %s34 = sphi 0, %s33
    %s50 = sphi 0, %s34
    %s56 = sphi 0, %s58
    %s59 = sphi 0, %s56
    %s60 = sphi 0, %s59
    %s76 = sphi 0, %s60
    %s84 = sphi 0, %s86
    %s87 = sphi 0, %s84
    %s88 = sphi 0, %s87
    %s104 = sphi 0, %s88
  $region4: #{c4s2_forward.1} parent=0 // loop_header_branch
    %11 = sbr.rel (%p9) target = $region8
  $region5: #{c4s2_forward.1} parent=0 // loop_body
    %s13 = ssub.s32 %s8, 1
    %s14 = ssub.s32 %s8, 2
    %s21 = sadd.s32 1, %s16
    %p22 = scmp.ge.s32.totalorder %s21, 1
    %s23 = scalar_select %p22, 0, %s21
    %s24 = sadd.s32 1, %s15
    %s25 = scalar_select %p22, %s24, %s15
    %p26 = scmp.ge.s32.totalorder %s25, 2
    %s27 = scalar_select %p26, 0, %s25
    %s28 = ssub.s32 %s15, %s27
    %p29 = scmp.eq.s32.totalorder %s28, 0
    %s31 = sadd.s32 %s30, 1
    %s32 = scalar_select %p29, %s30, %s31
    %p35 = pneg %p29
    %p36 = scmp.eq.s32.totalorder %s8, 1
    %p37 = por %p35, %p36
    %p38 = scmp.ne.s32.totalorder %s30, %s33
    %p39 = scmp.eq.s32.totalorder %s8, 0
    %p40 = por %p38, %p39
    %p41 = scmp.ne.s32.totalorder %s30, %s33
    %p42 = scmp.eq.s32.totalorder %s13, 1
    %p43 = por %p41, %p42
    %p44 = scmp.ne.s32.totalorder %s33, %s34
    %p45 = scmp.eq.s32.totalorder %s13, 0
    %p46 = por %p44, %p45
    %p47 = scmp.ne.s32.totalorder %s33, %s34
    %p48 = scmp.eq.s32.totalorder %s14, 1
    %p49 = por %p47, %p48
    %p51 = scmp.ne.s32.totalorder %s34, %s50
    %p52 = scmp.eq.s32.totalorder %s14, 0
    %p53 = por %p51, %p52
    %s54 = ssub.s32 %s16, %s23
    %p55 = scmp.eq.s32.totalorder %s54, 0
    %s57 = sadd.s32 %s56, 1
    %s58 = scalar_select %p55, %s56, %s57
    %p61 = pneg %p55
    %p62 = scmp.eq.s32.totalorder %s8, 1
    %p63 = por %p61, %p62
    %p64 = scmp.ne.s32.totalorder %s56, %s59
    %p65 = scmp.eq.s32.totalorder %s8, 0
    %p66 = por %p64, %p65
    %p67 = scmp.ne.s32.totalorder %s56, %s59
    %p68 = scmp.eq.s32.totalorder %s13, 1
    %p69 = por %p67, %p68
    %p70 = scmp.ne.s32.totalorder %s59, %s60
    %p71 = scmp.eq.s32.totalorder %s13, 0
    %p72 = por %p70, %p71
    %p73 = scmp.ne.s32.totalorder %s59, %s60
    %p74 = scmp.eq.s32.totalorder %s14, 1
    %p75 = por %p73, %p74
    %p77 = scmp.ne.s32.totalorder %s60, %s76
    %p78 = scmp.eq.s32.totalorder %s14, 0
    %p79 = por %p77, %p78
    %s80 = ssub.s32 %s15, %s27
    %s81 = ssub.s32 %s16, %s23
    %s82 = sor.u32 %s80, %s81
    %p83 = scmp.eq.s32.totalorder %s82, 0
    %s85 = sadd.s32 %s84, 1
    %s86 = scalar_select %p83, %s84, %s85
    %p89 = pneg %p83
    %p90 = scmp.eq.s32.totalorder %s8, 1
    %p91 = por %p89, %p90
    %p92 = scmp.ne.s32.totalorder %s84, %s87
    %p93 = scmp.eq.s32.totalorder %s8, 0
    %p94 = por %p92, %p93
    %p95 = scmp.ne.s32.totalorder %s84, %s87
    %p96 = scmp.eq.s32.totalorder %s13, 1
    %p97 = por %p95, %p96
    %p98 = scmp.ne.s32.totalorder %s87, %s88
    %p99 = scmp.eq.s32.totalorder %s13, 0
    %p100 = por %p98, %p99
    %p101 = scmp.ne.s32.totalorder %s87, %s88
    %p102 = scmp.eq.s32.totalorder %s14, 1
    %p103 = por %p101, %p102
    %p105 = scmp.ne.s32.totalorder %s88, %s104
    %p106 = scmp.eq.s32.totalorder %s14, 0
    %p107 = por %p105, %p106
    %p108 = scmp.le.s32.totalorder 1, %s8
    %p109 = scmp.lt.s32.totalorder %s8, 3
    %p110 = pnand %p108, %p109
    %p111 = pneg %p110
    // Predicated region
    $region9: #{c4s2_forward.1} parent=5 // pred_check
      _
    $region10: #{c4s2_forward.1} parent=5 // pred_check_branch
      %113 = sbr.rel (%p110) target = $region12
    $region11: #{c4s2_forward.1} parent=5 // pred_region
      %s114 = ssub.s32 %s8, 1
      // Predicated region
      $region13: #{c4s2_forward.1} parent=11 // pred_check
        %p115 = pneg %p72
      $region14: #{c4s2_forward.1} parent=11 // pred_check_branch
        %117 = sbr.rel (%p115) target = $region16
      $region15: #{c4s2_forward.1} parent=11 // pred_region
        %p118 = scmp.lt.s32.totalorder %s18, 0
        %s119 = scalar_select %p118, %s18, 0
        %s120 = smul.addr %s119, 4
        %s121 = scalar_lea.vmem %s1, %s120
      $region16: #{c4s2_forward.1} parent=11 // pred_fallthru
        _
    $region12: #{c4s2_forward.1} parent=5 // pred_fallthru
      _
    %p122 = scmp.lt.s32.totalorder %s8, 2
    // Predicated region
    $region17: #{c4s2_forward.1} parent=5 // pred_check
      %p123 = pneg %p122
    $region18: #{c4s2_forward.1} parent=5 // pred_check_branch
      %125 = sbr.rel (%p123) target = $region20
    $region19: #{c4s2_forward.1} parent=5 // pred_region
      // Predicated region
      $region21: #{c4s2_forward.1} parent=19 // pred_check
        %p126 = pneg %p40
      $region22: #{c4s2_forward.1} parent=19 // pred_check_branch
        %128 = sbr.rel (%p126) target = $region24
      $region23: #{c4s2_forward.1} parent=19 // pred_region
        %p129 = scmp.lt.s32.totalorder %s15, 1
        %s130 = scalar_select %p129, %s15, 1
        %s131 = smul.addr %s130, 7
        %s132 = smul.addr %s131, 4
        %s133 = scalar_lea.vmem %s0, %s132
      $region24: #{c4s2_forward.1} parent=19 // pred_fallthru
        _
    $region20: #{c4s2_forward.1} parent=5 // pred_fallthru
      _
    %p134 = scmp.le.s32.totalorder 1, %s8
    %p135 = scmp.lt.s32.totalorder %s8, 3
    %p136 = pnand %p134, %p135
    %p137 = pneg %p136
    // Predicated region
    $region25: #{c4s2_forward.1} parent=5 // pred_check
      _
    $region26: #{c4s2_forward.1} parent=5 // pred_check_branch
      %139 = sbr.rel (%p136) target = $region28
    $region27: #{c4s2_forward.1} parent=5 // pred_region
      %s140 = ssub.s32 %s8, 1
      %p141 = scmp.lt.s32.totalorder %s17, 1
      %s142 = scalar_select %p141, %s17, 1
      %s143 = smul.addr %s142, 7
      %s144 = smul.addr %s143, 4
      %s145 = scalar_lea.vmem %s0, %s144
      %p146 = pneg %p46
      %p147 = pneg %p43
      %p148 = scmp.lt.s32.totalorder %s18, 0
      %s149 = scalar_select %p148, %s18, 0
      %s150 = smul.addr %s149, 4
      %s151 = scalar_lea.vmem %s1, %s150
      %p152 = pneg %p72
      %p153 = pneg %p69
      %p154 = pneg %p100
      %p155 = pneg %p97
      %p156 = scmp.lt.s32.totalorder %s17, 1
      %s157 = scalar_select %p156, %s17, 1
      %p158 = scmp.lt.s32.totalorder %s18, 0
      %s159 = scalar_select %p158, %s18, 0
      %s160 = smul.addr %s157, 7
      %s161 = sadd.s32 %s159, %s160
      %s162 = smul.addr %s161, 8
      %s163 = scalar_lea.vmem %s2, %s162
      %p164 = scmp.lt.s32.totalorder %s17, 1
      %s165 = scalar_select %p164, %s17, 1
      %s166 = smul.addr %s165, 7
      %s167 = smul.addr %s166, 4
      %s168 = scalar_lea.vmem %s0, %s167
      %p169 = scmp.lt.s32.totalorder %s18, 0
      %s170 = scalar_select %p169, %s18, 0
      %s171 = smul.addr %s170, 4
      %s172 = scalar_lea.vmem %s1, %s171
      %p173 = scmp.lt.s32.totalorder %s17, 1
      %s174 = scalar_select %p173, %s17, 1
      %p175 = scmp.lt.s32.totalorder %s18, 0
      %s176 = scalar_select %p175, %s18, 0
      %s177 = smul.addr %s174, 7
      %s178 = sadd.s32 %s176, %s177
      %s179 = smul.addr %s178, 8
      %s180 = scalar_lea.vmem %s2, %s179
      %v182 = vld [vmem:[%s168] sm:$0xf]
      %v183 = vld [vmem:[%s168 + $0x4] sm:$0xf]
      %v184 = vld [vmem:[%s168 + $0x8] sm:$0xf]
      %v185 = vld [vmem:[%s168 + $0xc] sm:$0xf]
      %v186 = vld [vmem:[%s168 + $0x10] sm:$0xf]
      %v187 = vld [vmem:[%s168 + $0x14] sm:$0xf]
      %v188 = vld [vmem:[%s168 + $0x18] sm:$0x1]
      %v189 = vld [vmem:[%s172] sm:$0xf]
      %v190 = vld [vmem:[%s172 + $0x4] sm:$0xf]
      %v191 = vld [vmem:[%s172 + $0x8] sm:$0xf]
      %v192 = vld [vmem:[%s172 + $0xc] sm:$0xf]
      %v193 = vld [vmem:[%s172 + $0x10] sm:$0xf]
      %v194 = vld [vmem:[%s172 + $0x14] sm:$0xf]
      %v195 = vld [vmem:[%s172 + $0x18] sm:$0xf]
      %v196 = vld [vmem:[%s172 + $0x1c] sm:$0xf]
      %v204 = vunpack.c.l.b16 %v182
      %v205 = vunpack.c.l.b16 %v183
      %v206 = vunpack.c.l.b16 %v184
      %v207 = vunpack.c.l.b16 %v185
      %v208 = vunpack.c.l.b16 %v186
      %v209 = vunpack.c.l.b16 %v187
      %v210 = vunpack.c.l.b16 %v188
      %v211 = vpack.c.b16 %v205, %v204
      %v212 = vpack.c.b16 %v207, %v206
      %v213 = vpack.c.b16 %v209, %v208
      %v214 = vpack.c.b16 %v210, %v210
      %v223 = vunpack.c.l.b16 %v189
      %v224 = vunpack.c.l.b16 %v190
      %v225 = vunpack.c.l.b16 %v191
      %v226 = vunpack.c.l.b16 %v192
      %v227 = vunpack.c.l.b16 %v193
      %v228 = vunpack.c.l.b16 %v194
      %v229 = vunpack.c.l.b16 %v195
      %v230 = vunpack.c.l.b16 %v196
      %v231 = vpack.c.b16 %v224, %v223
      %v232 = vpack.c.b16 %v226, %v225
      %v233 = vpack.c.b16 %v228, %v227
      %v234 = vpack.c.b16 %v230, %v229
      %vm239 = vcmask 523264
      %v241 = vsel %vm239, %v211, 0
      %v244 = vsel %vm239, %v212, 0
      %v247 = vsel %vm239, %v213, 0
      %v250 = vsel %vm239, %v214, 0
      %252 = vmatprep.subr.bf16.mxu0 0
      %253 = vmatpush1.bf16.msra.mxu0 %v231
      %254 = vmatprep.subr.bf16.mxu0 0
      %255 = vmatpush1.bf16.msra.mxu0 %v232
      %256 = vmatprep.subr.bf16.mxu0 0
      %257 = vmatpush1.bf16.msra.mxu0 %v233
      %258 = vmatprep.subr.bf16.mxu0 0
      %259 = vmatpush1.bf16.msra.mxu0 %v234
      %260 = vmatprep.subr.bf16.mxu0 0
      %261 = vmatpush1.bf16.msra.mxu0 0
      %262 = vmatprep.subr.bf16.mxu0 0
      %263 = vmatpush1.bf16.msra.mxu0 0
      %264 = vmatprep.subr.bf16.mxu0 0
      %265 = vmatpush1.bf16.msra.mxu0 0
      %266 = vmatprep.subr.bf16.mxu0 0
      %267 = vmatpush1.bf16.msra.mxu0 0
      %268 = vmatprep.subr.bf16.mxu0 0
      %269 = vmatpush1.bf16.msra.mxu0 0
      %270 = vmatprep.subr.bf16.mxu0 0
      %271 = vmatpush1.bf16.msra.mxu0 0
      %272 = vmatprep.subr.bf16.mxu0 0
      %273 = vmatpush1.bf16.msra.mxu0 0
      %274 = vmatprep.subr.bf16.mxu0 0
      %275 = vmatpush1.bf16.msra.mxu0 0
      %276 = vmatprep.subr.bf16.mxu0 0
      %277 = vmatpush1.bf16.msra.mxu0 0
      %278 = vmatprep.subr.bf16.mxu0 0
      %279 = vmatpush1.bf16.msra.mxu0 0
      %280 = vmatprep.subr.bf16.mxu0 0
      %281 = vmatpush1.bf16.msra.mxu0 0
      %282 = vmatprep.subr.bf16.mxu0 0
      %283 = vmatpush1.bf16.msra.mxu0 0
      %284 = vmatprep.mubr.bf16.mxu0 0
      %285 = vmatmul.mubr.bf16.gmra.mrb[0].mxu0 %v241
      %v286 = vpop.f32.mrb[0].mxu0
      %v287 = vadd.f32 0.0, %v286
      %v288 = vpop.f32.mrb[0].mxu0
      %v289 = vpop.f32.mrb[0].mxu0
      %v290 = vadd.f32 0.0, %v289
      %v291 = vpop.f32.mrb[0].mxu0
      %292 = vmatprep.mubr.bf16.mxu0 0
      %293 = vmatmul.mubr.bf16.gmra.mrb[0].mxu0 %v244
      %v294 = vpop.f32.mrb[0].mxu0
      %v295 = vadd.f32 0.0, %v294
      %v296 = vpop.f32.mrb[0].mxu0
      %v297 = vpop.f32.mrb[0].mxu0
      %v298 = vadd.f32 0.0, %v297
      %v299 = vpop.f32.mrb[0].mxu0
      %300 = vmatprep.mubr.bf16.mxu0 0
      %301 = vmatmul.mubr.bf16.gmra.mrb[0].mxu0 %v247
      %v302 = vpop.f32.mrb[0].mxu0
      %v303 = vadd.f32 0.0, %v302
      %v304 = vpop.f32.mrb[0].mxu0
      %v305 = vpop.f32.mrb[0].mxu0
      %v306 = vadd.f32 0.0, %v305
      %v307 = vpop.f32.mrb[0].mxu0
      %308 = vmatprep.mubr.bf16.mxu0 0
      %309 = vmatmul.mubr.bf16.gmra.mrb[0].mxu0 %v250
      %v310 = vpop.f32.mrb[0].mxu0
      %v311 = vadd.f32 0.0, %v310
      %v312 = vpop.f32.mrb[0].mxu0
      %v313 = vpop.f32.mrb[0].mxu0
      %v314 = vpop.f32.mrb[0].mxu0
      %315 = vdwg.mxu0
      %v316 = vadd.f32 %v287, %v290
      %v317 = vadd.f32 %v316, %v295
      %v318 = vadd.f32 %v317, %v298
      %v319 = vadd.f32 %v318, %v303
      %v320 = vadd.f32 %v319, %v306
      %vm321 = vcmask 1040384
      %v322 = vsel %vm321, %v311, 0.0
      %v323 = vadd.f32 %v320, %v322
      %v324 = vrot.slane %v323, 4
      %v325 = vadd.f32 %v323, %v324
      %v326 = vrot.slane %v325, 2
      %v327 = vadd.f32 %v325, %v326
      %v328 = vrot.slane %v327, 1
      %v329 = vadd.f32 %v327, %v328
      %v330 = vmul.f32 %v287, %v287
      %v331 = vmul.f32 %v290, %v290
      %v332 = vmul.f32 %v295, %v295
      %v333 = vmul.f32 %v298, %v298
      %v334 = vmul.f32 %v303, %v303
      %v335 = vmul.f32 %v306, %v306
      %v336 = vmul.f32 %v311, %v311
      %v337 = vadd.f32 %v330, %v331
      %v338 = vadd.f32 %v337, %v332
      %v339 = vadd.f32 %v338, %v333
      %v340 = vadd.f32 %v339, %v334
      %v341 = vadd.f32 %v340, %v335
      %v342 = vsel %vm321, %v336, 0.0
      %v343 = vadd.f32 %v341, %v342
      %v344 = vrot.slane %v343, 4
      %v345 = vadd.f32 %v343, %v344
      %v346 = vrot.slane %v345, 2
      %v347 = vadd.f32 %v345, %v346
      %v348 = vrot.slane %v347, 1
      %v349 = vadd.f32 %v347, %v348
      %v350 = vmul.f32 %v329, 0.020408163
      %v351 = vmul.f32 %v349, 0.020408163
      %v352 = vmul.f32 %v350, %v350
      %v353 = vsub.f32 %v351, %v352
      %v354 = vmax.f32 %v353, 0.0
      %v355 = vadd.f32 %v354, 1e-05
      %v356 = vrsqrt.pop %v355
      %v357 = vmul.f32 %v287, %v356
      %v358 = vmul.f32 %v290, %v356
      %v359 = vmul.f32 %v295, %v356
      %v360 = vmul.f32 %v298, %v356
      %v361 = vmul.f32 %v303, %v356
      %v362 = vmul.f32 %v306, %v356
      %v363 = vmul.f32 %v311, %v356
      %v364 = vsub.f32 0.0, %v350
      %v365 = vmul.f32 %v364, %v356
      %v366 = vadd.f32 %v357, %v365
      %v367 = vadd.f32 %v358, %v365
      %v368 = vadd.f32 %v359, %v365
      %v369 = vadd.f32 %v360, %v365
      %v370 = vadd.f32 %v361, %v365
      %v371 = vadd.f32 %v362, %v365
      %v372 = vadd.f32 %v363, %v365
      %v373 = vmul.f32 %v366, 0.2
      %v374 = vmul.f32 %v367, 0.2
      %v375 = vmul.f32 %v368, 0.2
      %v376 = vmul.f32 %v369, 0.2
      %v377 = vmul.f32 %v370, 0.2
      %v378 = vmul.f32 %v371, 0.2
      %v379 = vmul.f32 %v372, 0.2
      %v380 = vmax.f32 %v366, %v373
      %v381 = vmax.f32 %v367, %v374
      %v382 = vmax.f32 %v368, %v375
      %v383 = vmax.f32 %v369, %v376
      %v384 = vmax.f32 %v370, %v377
      %v385 = vmax.f32 %v371, %v378
      %v386 = vmax.f32 %v372, %v379
      %387 = vst [vmem:[%s180] sm:$0xff] %v380
      %388 = vst [vmem:[%s180 + $0x8] sm:$0xff] %v381
      %389 = vst [vmem:[%s180 + $0x10] sm:$0xff] %v382
      %390 = vst [vmem:[%s180 + $0x18] sm:$0xff] %v383
      %391 = vst [vmem:[%s180 + $0x20] sm:$0xff] %v384
      %392 = vst [vmem:[%s180 + $0x28] sm:$0xff] %v385
      %393 = vst [vmem:[%s180 + $0x30] sm:$0x1] %v386
      %p394 = scmp.lt.s32.totalorder %s17, 1
      %s395 = scalar_select %p394, %s17, 1
      %p396 = scmp.lt.s32.totalorder %s18, 0
      %s397 = scalar_select %p396, %s18, 0
      %s398 = smul.addr %s395, 7
      %s399 = sadd.s32 %s397, %s398
      %s400 = smul.addr %s399, 8
      %s401 = scalar_lea.vmem %s2, %s400
      // Predicated region
      $region29: #{c4s2_forward.1} parent=27 // pred_check
        %p402 = pneg %p97
      $region30: #{c4s2_forward.1} parent=27 // pred_check_branch
        %404 = sbr.rel (%p402) target = $region32
      $region31: #{c4s2_forward.1} parent=27 // pred_region
        _
      $region32: #{c4s2_forward.1} parent=27 // pred_fallthru
        _
    $region28: #{c4s2_forward.1} parent=5 // pred_fallthru
      _
    %p405 = scmp.le.s32.totalorder 2, %s8
    // Predicated region
    $region33: #{c4s2_forward.1} parent=5 // pred_check
      %p406 = pneg %p405
    $region34: #{c4s2_forward.1} parent=5 // pred_check_branch
      %408 = sbr.rel (%p406) target = $region36
    $region35: #{c4s2_forward.1} parent=5 // pred_region
      %s409 = ssub.s32 %s8, 2
      // Predicated region
      $region37: #{c4s2_forward.1} parent=35 // pred_check
        %p410 = pneg %p103
      $region38: #{c4s2_forward.1} parent=35 // pred_check_branch
        %412 = sbr.rel (%p410) target = $region40
      $region39: #{c4s2_forward.1} parent=35 // pred_region
        %p413 = scmp.lt.s32.totalorder %s19, 1
        %s414 = scalar_select %p413, %s19, 1
        %p415 = scmp.lt.s32.totalorder %s20, 0
        %s416 = scalar_select %p415, %s20, 0
        %s417 = smul.addr %s414, 7
        %s418 = sadd.s32 %s416, %s417
        %s419 = smul.addr %s418, 8
        %s420 = scalar_lea.vmem %s2, %s419
      $region40: #{c4s2_forward.1} parent=35 // pred_fallthru
        _
    $region36: #{c4s2_forward.1} parent=5 // pred_fallthru
      _
  $region6: #{c4s2_forward.1} parent=0 // loop_footer
    %s12 = sadd.s32 1, %s8
  $region7: #{c4s2_forward.1} parent=0 // loop_footer_branch
    %7 = sbr.rel target = $region3
  $region8: #{c4s2_forward.1} parent=0 // loop_exit
    _

</llo_original>
